<compile_context>
chip_gen: v7x
topology: tpu7x:2x2x1
jax: 0.10.0
libtpu: 0.0.40
codegen_flags: <defaults>
</compile_context>

<pallas_src>
import functools

import jax
import jax.numpy as jnp
from jax import lax
from jax.experimental import pallas as pl
from jax.experimental.pallas import tpu as pltpu


def _round_up(v, m):
    return ((v + m - 1) // m) * m


def _cdiv(a, b):
    return (a + b - 1) // b


def _tree_sum(parts):
    parts = list(parts)
    while len(parts) > 1:
        nxt = []
        for a in range(0, len(parts) - 1, 2):
            nxt.append(parts[a] + parts[a + 1])
        if len(parts) % 2:
            nxt.append(parts[-1])
        parts = nxt
    return parts[0]


def _linea_vae_loss_kernel(beta_ref, xhat_ref, x_ref, mean_ref, logvar_ref,
                           out_ref, acc_rec_ref, acc_kld_ref, *,
                           tile_b, n_per_core, batch, nacc, needs_mask):
    c = pl.program_id(0)          # core-split axis ("parallel")
    i = pl.program_id(1)          # streaming/reduction axis ("arbitrary")

    @pl.when(i == 0)
    def _init():
        acc_rec_ref[...] = jnp.zeros_like(acc_rec_ref)
        acc_kld_ref[...] = jnp.zeros_like(acc_kld_ref)

    feat = xhat_ref.shape[1]
    lat = mean_ref.shape[1]
    n_slices = tile_b // 8
    n_chunks = n_slices // nacc

    # Logical (unclamped) first row of this tile; used only for tail masking.
    base_row = (c * n_per_core + i) * tile_b

    if needs_mask:
        # (8, 1) sublane iota, hoisted out of the loop; lane-broadcast in where().
        sub_iota = lax.broadcasted_iota(jnp.int32, (8, 1), 0)

    def chunk_body(chunk, carry):
        rec_parts, kld_parts = carry
        rec_parts = list(rec_parts)
        kld_parts = list(kld_parts)
        for j in range(nacc):
            s = chunk * nacc + j
            start = s * 8
            if not isinstance(start, int):
                start = pl.multiple_of(start, 8)
            # 8-row Ref slices: a few vregs live at a time, no big temporaries.
            xh = xhat_ref[pl.ds(start, 8), :].astype(jnp.float32)
            xr = x_ref[pl.ds(start, 8), :].astype(jnp.float32)
            d = xh - xr
            sq = d * d
            mu = mean_ref[pl.ds(start, 8), :].astype(jnp.float32)
            lv = logvar_ref[pl.ds(start, 8), :].astype(jnp.float32)
            kt = 1.0 + lv - mu * mu - jnp.exp(lv)
            if needs_mask:
                row_ok = (base_row + start + sub_iota) < batch     # (8, 1) bool
                sq = jnp.where(row_ok, sq, 0.0)
                kt = jnp.where(row_ok, kt, 0.0)
            rec_parts[j] = rec_parts[j] + sq
            kld_parts[j] = kld_parts[j] + kt
        return tuple(rec_parts), tuple(kld_parts)

    init = (tuple(jnp.zeros((8, feat), jnp.float32) for _ in range(nacc)),
            tuple(jnp.zeros((8, lat), jnp.float32) for _ in range(nacc)))

    if n_chunks <= 8:
        carry = init
        for ch in range(n_chunks):
            carry = chunk_body(ch, carry)
        rec_parts, kld_parts = carry
    else:
        rec_parts, kld_parts = lax.fori_loop(0, n_chunks, chunk_body, init)

    # Exactly one VMEM scratch store per accumulator per grid step.
    acc_rec_ref[...] += _tree_sum(rec_parts)
    acc_kld_ref[...] += _tree_sum(kld_parts)

    @pl.when(i == n_per_core - 1)
    def _finalize():
        rec = jnp.sum(acc_rec_ref[...])           # single cross-lane reduce
        kld = -0.5 * jnp.sum(acc_kld_ref[...])    # single cross-lane reduce
        partial = rec + beta_ref[0] * kld
        out_ref[...] = jnp.full(out_ref.shape, partial, dtype=out_ref.dtype)


_TARGET_STEP_BYTES = 8 << 20   # streamed HBM bytes per grid step to amortize overhead
_MAX_TILE_B = 8192


def _device_vmem_bytes():
    try:
        info = pltpu.get_tpu_info()
        cap = getattr(info, "vmem_capacity_bytes", None)
        if cap:
            return int(cap)
    except Exception:
        pass
    return 64 << 20   # conservative default (v7x-sized VMEM)


@jax.jit
def _linea_vae_loss_call(beta, x_hat, x, mean, log_var):
    batch = x_hat.shape[0]
    x_hat = x_hat.reshape(batch, -1)
    x = x.reshape(batch, -1)
    mean = mean.reshape(batch, -1)
    log_var = log_var.reshape(batch, -1)
    feat = x_hat.shape[1]
    lat = mean.shape[1]

    itemsize = max(jnp.dtype(t.dtype).itemsize for t in (x_hat, x, mean, log_var))
    feat_pad = _round_up(feat, 128)
    lat_pad = _round_up(lat, 128)

    # Per-generation VMEM ceiling (~48 MiB on v7x's 64 MiB, ~96 MiB on v5e/v6e).
    vmem_ceiling = min(_device_vmem_bytes() * 3 // 4, 96 << 20)
    stream_budget = vmem_ceiling * 4 // 5

    row_hbm_bytes = 2 * (feat + lat) * itemsize             # streamed per batch row
    row_vmem_bytes = 2 * (feat_pad + lat_pad) * itemsize    # lane-padded, per buffer

    # Independent accumulators: keep the rec accumulator set at <= ~8 vregs.
    nacc = max(1, min(4, 1024 // feat_pad))

    tile_b = min(_TARGET_STEP_BYTES // max(1, row_hbm_bytes),
                 stream_budget // max(1, 2 * row_vmem_bytes),
                 _MAX_TILE_B,
                 _round_up(batch, 8))
    tile_b = max(8, (tile_b // 8) * 8)
    if tile_b >= 8 * nacc:
        tile_b = (tile_b // (8 * nacc)) * (8 * nacc)
    else:
        nacc = max(1, tile_b // 8)
    while (tile_b // 8) % nacc:
        nacc -= 1

    n_tiles_real = _cdiv(batch, tile_b)
    num_cores = 2 if n_tiles_real >= 2 else 1      # v7x dual-TC; sequential elsewhere
    n_per_core = _cdiv(n_tiles_real, num_cores)
    covered = num_cores * n_per_core * tile_b
    needs_mask = covered > batch
    has_oob_tiles = num_cores * n_per_core > n_tiles_real
    last_tile = n_tiles_real - 1

    # Explicit scoped-VMEM budget: double-buffered lane-padded streams +
    # accumulators + output block + proportional spill/compiler slack.
    vmem_limit = (2 * tile_b * row_vmem_bytes
                  + 8 * (feat_pad + lat_pad) * 4
                  + 2 * 8 * 128 * 4)
    vmem_limit += max(2 << 20, vmem_limit // 4)
    vmem_limit = int(min(vmem_ceiling, max(16 << 20, vmem_limit)))

    beta_arr = jnp.reshape(beta.astype(jnp.float32), (1,))

    kernel = functools.partial(
        _linea_vae_loss_kernel,
        tile_b=tile_b, n_per_core=n_per_core, batch=batch,
        nacc=nacc, needs_mask=needs_mask)

    def _tile_map(c, i):
        t = c * n_per_core + i
        if has_oob_tiles:
            # Duplicate (fully masked) tiles re-read the last real tile: no OOB DMA.
            t = jnp.minimum(t, last_tile)
        return (t, 0)

    out = pl.pallas_call(
        kernel,
        out_shape=jax.ShapeDtypeStruct((num_cores * 8, 128), jnp.float32),
        grid=(num_cores, n_per_core),
        in_specs=[
            pl.BlockSpec(memory_space=pltpu.MemorySpace.SMEM),    # beta scalar
            pl.BlockSpec((tile_b, feat), _tile_map),              # x_hat tile
            pl.BlockSpec((tile_b, feat), _tile_map),              # x tile
            pl.BlockSpec((tile_b, lat), _tile_map),               # mean tile
            pl.BlockSpec((tile_b, lat), _tile_map),               # log_var tile
        ],
        out_specs=pl.BlockSpec((8, 128), lambda c, i: (c, 0)),    # per-core partial
        scratch_shapes=[
            pltpu.VMEM((8, feat), jnp.float32),                   # rec partials
            pltpu.VMEM((8, lat), jnp.float32),                    # kld partials
        ],
        compiler_params=pltpu.CompilerParams(
            dimension_semantics=("parallel", "arbitrary"),
            vmem_limit_bytes=vmem_limit,
        ),
    )(beta_arr, x_hat, x, mean, log_var)

    partials = out.reshape(num_cores, 8, 128)[:, 0, 0]
    return jnp.sum(partials)


class LineaVAELoss:
    """JAX/Pallas port of commons/torchx/nn/networks/vaenet.py::LineaVAELoss."""

    def __init__(self, beta=1, cycle=None):
        self.beta = beta
        if cycle is None:
            ramp, const = (0, 0)
        else:
            ramp, const = cycle
        self.ramp = ramp
        self.const = const
        self.cycle_id = 0

    def _compute_beta(self):
        if self.ramp == 0:
            return self.beta
        plen = self.cycle_id % (self.ramp + self.const)
        if plen >= self.ramp:
            beta = self.beta
        else:
            beta = self.beta * plen / self.ramp
        self.cycle_id += 1
        return beta

    def __call__(self, y, x):
        beta = self._compute_beta()  # host-side schedule state, same as the module
        x_hat, mean, log_var = y
        return _linea_vae_loss_call(
            jnp.asarray(beta, dtype=jnp.float32), x_hat, x, mean, log_var)


def _reference(beta, x_hat, x, mean, log_var):
    rec = jnp.sum((x_hat.astype(jnp.float32) - x.astype(jnp.float32)) ** 2)
    kld = -0.5 * jnp.sum(1.0 + log_var.astype(jnp.float32)
                         - mean.astype(jnp.float32) ** 2
                         - jnp.exp(log_var.astype(jnp.float32)))
    return rec + beta * kld


if __name__ == "__main__":
    key = jax.random.PRNGKey(0)
    k1, k2, k3, k4, k5, k6, k7, k8 = jax.random.split(key, 8)

    # --- Small test: single tile, tail masking path ---
    batch, features, latent = 2, 32, 8
    x = jax.random.normal(k1, (batch, features), dtype=jnp.float32)
    x_hat = jax.random.normal(k2, (batch, features), dtype=jnp.float32)
    mean = jax.random.normal(k3, (batch, latent), dtype=jnp.float32)
    log_var = 0.1 * jax.random.normal(k4, (batch, latent), dtype=jnp.float32)

    loss_fn = LineaVAELoss(beta=1.0, cycle=None)
    loss = jax.block_until_ready(loss_fn((x_hat, mean, log_var), x))
    ref = _reference(1.0, x_hat, x, mean, log_var)
    assert jnp.allclose(loss, ref, rtol=1e-5, atol=1e-4), (loss, ref)

    # --- Larger test: multi-tile grid, dual-core split + boundary masking ---
    b2, f2, l2 = 520, 256, 16
    x_b = jax.random.normal(k5, (b2, f2), dtype=jnp.float32)
    xh_b = jax.random.normal(k6, (b2, f2), dtype=jnp.float32)
    mu_b = jax.random.normal(k7, (b2, l2), dtype=jnp.float32)
    lv_b = 0.1 * jax.random.normal(k8, (b2, l2), dtype=jnp.float32)

    loss_fn2 = LineaVAELoss(beta=0.5, cycle=(2, 3))  # cycle schedule: first beta = 0
    loss2 = jax.block_until_ready(loss_fn2((xh_b, mu_b, lv_b), x_b))
    ref2 = _reference(0.0, xh_b, x_b, mu_b, lv_b)
    assert jnp.allclose(loss2, ref2, rtol=1e-4, atol=1e-2), (loss2, ref2)

    print("KERNEL_OK")
</pallas_src>

<mosaic_0001>
module attributes {stable_mosaic.version = 11 : i64} {
  func.func @_linea_vae_loss_kernel(%arg0: i32, %arg1: i32, %arg2: memref<1xf32, #tpu.memory_space<smem>>, %arg3: memref<8x32xf32, #tpu.memory_space<vmem>>, %arg4: memref<8x32xf32, #tpu.memory_space<vmem>>, %arg5: memref<8x8xf32, #tpu.memory_space<vmem>>, %arg6: memref<8x8xf32, #tpu.memory_space<vmem>>, %arg7: memref<8x128xf32, #tpu.memory_space<vmem>>, %arg8: memref<8x32xf32, #tpu.memory_space<vmem>>, %arg9: memref<8x8xf32, #tpu.memory_space<vmem>>) attributes {dimension_semantics = [#tpu.dimension_semantics<parallel>, #tpu.dimension_semantics<arbitrary>], iteration_bounds = array<i64: 1, 1>, scalar_prefetch = 0 : i64, scratch_operands = 2 : i64, tpu.core_type = #tpu.core_type<tc>, window_params = [{transform_indices = @transform_0, window_bounds = array<i64: 1>}, {transform_indices = @transform_1, window_bounds = array<i64: 8, 32>}, {transform_indices = @transform_2, window_bounds = array<i64: 8, 32>}, {transform_indices = @transform_3, window_bounds = array<i64: 8, 8>}, {transform_indices = @transform_4, window_bounds = array<i64: 8, 8>}, {transform_indices = @transform_5, window_bounds = array<i64: 8, 128>}]} {
    %c0_i32 = arith.constant 0 : i32
    %0 = arith.cmpi eq, %arg1, %c0_i32 : i32
    %1 = arith.extui %0 : i1 to i32
    %c0_i32_0 = arith.constant 0 : i32
    %2 = arith.cmpi ne, %1, %c0_i32_0 : i32
    scf.if %2 {
      %cst_23 = arith.constant 0.000000e+00 : f32
      %45 = vector.broadcast %cst_23 : f32 to vector<8x32xf32>
      %c0_24 = arith.constant 0 : index
      %c0_25 = arith.constant 0 : index
      %46 = vector.load %arg8[%c0_24, %c0_25] : memref<8x32xf32, #tpu.memory_space<vmem>>, vector<8x32xf32>
      tpu.vector_store %arg8[%c0_24, %c0_25], %45 {strides = array<i32>} : memref<8x32xf32, #tpu.memory_space<vmem>>, vector<8x32xf32>,
      %cst_26 = arith.constant 0.000000e+00 : f32
      %47 = vector.broadcast %cst_26 : f32 to vector<8x8xf32>
      %c0_27 = arith.constant 0 : index
      %c0_28 = arith.constant 0 : index
      %48 = vector.load %arg9[%c0_27, %c0_28] : memref<8x8xf32, #tpu.memory_space<vmem>>, vector<8x8xf32>
      tpu.vector_store %arg9[%c0_27, %c0_28], %47 {strides = array<i32>} : memref<8x8xf32, #tpu.memory_space<vmem>>, vector<8x8xf32>,
    } else {
    }
    %c1_i32 = arith.constant 1 : i32
    %3 = arith.muli %arg0, %c1_i32 : i32
    %4 = arith.addi %3, %arg1 : i32
    %c8_i32 = arith.constant 8 : i32
    %5 = arith.muli %4, %c8_i32 : i32
    %6 = tpu.iota {dimensions = array<i32: 0>} : vector<8x1xi32>
    %cst = arith.constant 0.000000e+00 : f32
    %7 = vector.broadcast %cst : f32 to vector<8x32xf32>
    %cst_1 = arith.constant 0.000000e+00 : f32
    %8 = vector.broadcast %cst_1 : f32 to vector<8x8xf32>
    %c0 = arith.constant 0 : index
    %c0_2 = arith.constant 0 : index
    %9 = vector.load %arg3[%c0, %c0_2] : memref<8x32xf32, #tpu.memory_space<vmem>>, vector<8x32xf32>
    %c0_3 = arith.constant 0 : index
    %c0_4 = arith.constant 0 : index
    %10 = vector.load %arg4[%c0_3, %c0_4] : memref<8x32xf32, #tpu.memory_space<vmem>>, vector<8x32xf32>
    %11 = arith.subf %9, %10 : vector<8x32xf32>
    %12 = arith.mulf %11, %11 : vector<8x32xf32>
    %c0_5 = arith.constant 0 : index
    %c0_6 = arith.constant 0 : index
    %13 = vector.load %arg5[%c0_5, %c0_6] : memref<8x8xf32, #tpu.memory_space<vmem>>, vector<8x8xf32>
    %c0_7 = arith.constant 0 : index
    %c0_8 = arith.constant 0 : index
    %14 = vector.load %arg6[%c0_7, %c0_8] : memref<8x8xf32, #tpu.memory_space<vmem>>, vector<8x8xf32>
    %cst_9 = arith.constant 1.000000e+00 : f32
    %15 = vector.broadcast %cst_9 : f32 to vector<8x8xf32>
    %16 = arith.addf %15, %14 : vector<8x8xf32>
    %17 = arith.mulf %13, %13 : vector<8x8xf32>
    %18 = arith.subf %16, %17 : vector<8x8xf32>
    %19 = math.exp %14 : vector<8x8xf32>
    %20 = arith.subf %18, %19 : vector<8x8xf32>
    %c0_i32_10 = arith.constant 0 : i32
    %21 = arith.addi %5, %c0_i32_10 : i32
    %22 = vector.broadcast %21 : i32 to vector<8x1xi32>
    %23 = arith.addi %22, %6 : vector<8x1xi32>
    %c2_i32 = arith.constant 2 : i32
    %24 = vector.broadcast %c2_i32 : i32 to vector<8x1xi32>
    %25 = arith.cmpi slt, %23, %24 : vector<8x1xi32>
    %cst_11 = arith.constant 0.000000e+00 : f32
    %26 = vector.shape_cast %25 : vector<8x1xi1> to vector<8x1xi1>
    %27 = vector.broadcast %26 : vector<8x1xi1> to vector<8x32xi1>
    %28 = vector.broadcast %cst_11 : f32 to vector<8x32xf32>
    %29 = arith.select %27, %12, %28 : vector<8x32xi1>, vector<8x32xf32>
    %cst_12 = arith.constant 0.000000e+00 : f32
    %30 = vector.shape_cast %25 : vector<8x1xi1> to vector<8x1xi1>
    %31 = vector.broadcast %30 : vector<8x1xi1> to vector<8x8xi1>
    %32 = vector.broadcast %cst_12 : f32 to vector<8x8xf32>
    %33 = arith.select %31, %20, %32 : vector<8x8xi1>, vector<8x8xf32>
    %34 = arith.addf %7, %29 : vector<8x32xf32>
    %35 = arith.addf %8, %33 : vector<8x8xf32>
    %c0_13 = arith.constant 0 : index
    %c0_14 = arith.constant 0 : index
    %36 = vector.load %arg8[%c0_13, %c0_14] : memref<8x32xf32, #tpu.memory_space<vmem>>, vector<8x32xf32>
    %37 = arith.addf %36, %34 : vector<8x32xf32>
    %c0_15 = arith.constant 0 : index
    %c0_16 = arith.constant 0 : index
    %38 = vector.load %arg8[%c0_15, %c0_16] : memref<8x32xf32, #tpu.memory_space<vmem>>, vector<8x32xf32>
    tpu.vector_store %arg8[%c0_15, %c0_16], %37 {strides = array<i32>} : memref<8x32xf32, #tpu.memory_space<vmem>>, vector<8x32xf32>,
    %c0_17 = arith.constant 0 : index
    %c0_18 = arith.constant 0 : index
    %39 = vector.load %arg9[%c0_17, %c0_18] : memref<8x8xf32, #tpu.memory_space<vmem>>, vector<8x8xf32>
    %40 = arith.addf %39, %35 : vector<8x8xf32>
    %c0_19 = arith.constant 0 : index
    %c0_20 = arith.constant 0 : index
    %41 = vector.load %arg9[%c0_19, %c0_20] : memref<8x8xf32, #tpu.memory_space<vmem>>, vector<8x8xf32>
    tpu.vector_store %arg9[%c0_19, %c0_20], %40 {strides = array<i32>} : memref<8x8xf32, #tpu.memory_space<vmem>>, vector<8x8xf32>,
    %c0_i32_21 = arith.constant 0 : i32
    %42 = arith.cmpi eq, %arg1, %c0_i32_21 : i32
    %43 = arith.extui %42 : i1 to i32
    %c0_i32_22 = arith.constant 0 : i32
    %44 = arith.cmpi ne, %43, %c0_i32_22 : i32
    scf.if %44 {
      %c0_23 = arith.constant 0 : index
      %c0_24 = arith.constant 0 : index
      %45 = vector.load %arg8[%c0_23, %c0_24] : memref<8x32xf32, #tpu.memory_space<vmem>>, vector<8x32xf32>
      %46 = vector.shape_cast %45 : vector<8x32xf32> to vector<1x8x32xf32>
      %cst_25 = arith.constant dense<0.000000e+00> : vector<1xf32>
      %47 = vector.multi_reduction <add>, %46, %cst_25 [1, 2] : vector<1x8x32xf32> to vector<1xf32>
      %48 = vector.shape_cast %47 : vector<1xf32> to vector<1x1x1xf32>
      %49 = vector.extract %48[0, 0, 0] : f32 from vector<1x1x1xf32>
      %c0_26 = arith.constant 0 : index
      %c0_27 = arith.constant 0 : index
      %50 = vector.load %arg9[%c0_26, %c0_27] : memref<8x8xf32, #tpu.memory_space<vmem>>, vector<8x8xf32>
      %51 = vector.shape_cast %50 : vector<8x8xf32> to vector<1x8x8xf32>
      %cst_28 = arith.constant dense<0.000000e+00> : vector<1xf32>
      %52 = vector.multi_reduction <add>, %51, %cst_28 [1, 2] : vector<1x8x8xf32> to vector<1xf32>
      %53 = vector.shape_cast %52 : vector<1xf32> to vector<1x1x1xf32>
      %54 = vector.extract %53[0, 0, 0] : f32 from vector<1x1x1xf32>
      %cst_29 = arith.constant -5.000000e-01 : f32
      %55 = arith.mulf %cst_29, %54 : f32
      %c0_30 = arith.constant 0 : index
      %56 = memref.load %arg2[%c0_30] : memref<1xf32, #tpu.memory_space<smem>>
      %57 = arith.mulf %56, %55 : f32
      %58 = arith.addf %49, %57 : f32
      %59 = vector.broadcast %58 : f32 to vector<8x128xf32>
      %c0_31 = arith.constant 0 : index
      %c0_32 = arith.constant 0 : index
      %60 = vector.load %arg7[%c0_31, %c0_32] : memref<8x128xf32, #tpu.memory_space<vmem>>, vector<8x128xf32>
      tpu.vector_store %arg7[%c0_31, %c0_32], %59 {strides = array<i32>} : memref<8x128xf32, #tpu.memory_space<vmem>>, vector<8x128xf32>,
    } else {
    }
    return
  }
  func.func @transform_0(%arg0: i32, %arg1: i32) -> i32 {
    %c0_i32 = arith.constant 0 : i32
    %c0_i32_0 = arith.constant 0 : i32
    return %c0_i32 : i32
  }
  func.func @transform_1(%arg0: i32, %arg1: i32) -> (i32, i32) {
    %c1_i32 = arith.constant 1 : i32
    %0 = arith.muli %arg0, %c1_i32 : i32
    %1 = arith.addi %0, %arg1 : i32
    %c0_i32 = arith.constant 0 : i32
    %c0_i32_0 = arith.constant 0 : i32
    return %1, %c0_i32 : i32, i32
  }
  func.func @transform_2(%arg0: i32, %arg1: i32) -> (i32, i32) {
    %c1_i32 = arith.constant 1 : i32
    %0 = arith.muli %arg0, %c1_i32 : i32
    %1 = arith.addi %0, %arg1 : i32
    %c0_i32 = arith.constant 0 : i32
    %c0_i32_0 = arith.constant 0 : i32
    return %1, %c0_i32 : i32, i32
  }
  func.func @transform_3(%arg0: i32, %arg1: i32) -> (i32, i32) {
    %c1_i32 = arith.constant 1 : i32
    %0 = arith.muli %arg0, %c1_i32 : i32
    %1 = arith.addi %0, %arg1 : i32
    %c0_i32 = arith.constant 0 : i32
    %c0_i32_0 = arith.constant 0 : i32
    return %1, %c0_i32 : i32, i32
  }
  func.func @transform_4(%arg0: i32, %arg1: i32) -> (i32, i32) {
    %c1_i32 = arith.constant 1 : i32
    %0 = arith.muli %arg0, %c1_i32 : i32
    %1 = arith.addi %0, %arg1 : i32
    %c0_i32 = arith.constant 0 : i32
    %c0_i32_0 = arith.constant 0 : i32
    return %1, %c0_i32 : i32, i32
  }
  func.func @transform_5(%arg0: i32, %arg1: i32) -> (i32, i32) {
    %c0_i32 = arith.constant 0 : i32
    %c0_i32_0 = arith.constant 0 : i32
    return %arg0, %c0_i32 : i32, i32
  }
}

</mosaic_0001>

<llo_original>
// kernel: _linea_vae_loss_call.1
$region0: #{_linea_vae_loss_call.1}
  #allocation0 [shape = 'u32[]', space=smem, size = 0x4, offset = 0x4, fixed_abs, tag = 'smem constant byte address 0x4 - core index']
  #allocation1 [shape = 'u32[144,128]{1,0:T(1,128)}', space=vmem, size = 0x12000, scoped, tag = 'internal scratch']
  #allocation2 [shape = 'f32[8,32]{1,0:T(8,128)}', space=vmem, size = 0x1000, scoped, tag = 'scratch operand']
  #allocation3 [shape = 'f32[8,8]{1,0:T(8,128)}', space=vmem, size = 0x1000, scoped, tag = 'scratch operand']
  #allocation4 [shape = 'f32[1]{0:T(128)S(6)}', space=smem, size = 0x200, scoped, tag = 'scoped memory for _linea_vae_loss_call.1']
  %s0 = inlined_call_operand.<no memory space> [shape: f32[1], index: 0, kind: input, shape index: {}]
  %s1 = inlined_call_operand.vmem [shape: f32[2,32], index: 1, kind: input, shape index: {}]
  %s2 = inlined_call_operand.vmem [shape: f32[2,32], index: 2, kind: input, shape index: {}]
  %s3 = inlined_call_operand.vmem [shape: f32[2,8], index: 3, kind: input, shape index: {}]
  %s4 = inlined_call_operand.vmem [shape: f32[2,8], index: 4, kind: input, shape index: {}]
  %s5 = inlined_call_operand.vmem [shape: f32[8,128], index: 5, kind: output, shape index: {}]
  %s6 = sld [smem:[#allocation0]]
  $region38: #{_linea_vae_loss_call.1} parent=0
    _
  %s8 = ssub.s32 1, %s6
  %s9 = scalar_select 0, %s8, %s6
  %10 = sst [smem:[#allocation4]] %s0
  // Predicated region
  $region2: #{_linea_vae_loss_call.1} parent=0 // pred_check
    _
  $region3: #{_linea_vae_loss_call.1} parent=0 // pred_check_branch
    %12 = sbr.rel (0) target = $region5
  $region4: #{_linea_vae_loss_call.1} parent=0 // pred_region
    _
  $region5: #{_linea_vae_loss_call.1} parent=0 // pred_fallthru
    _
  // Predicated region
  $region6: #{_linea_vae_loss_call.1} parent=0 // pred_check
    _
  $region7: #{_linea_vae_loss_call.1} parent=0 // pred_check_branch
    %14 = sbr.rel (0) target = $region9
  $region8: #{_linea_vae_loss_call.1} parent=0 // pred_region
    %s15 = sadd.s32 0, 0
    %s16 = smul.u32 4, %s15
    %s17 = ssub.s32 1, %s16
    %s18 = smul.u32 32, %s17
    %p19 = scmp.lt.s32.totalorder %s16, 0
    %s20 = scalar_select %p19, %s16, 0
    %s21 = smul.addr %s20, 2
    %s22 = scalar_lea.vmem %s1, %s21
    %s23 = sadd.s32 0, 0
    %s24 = smul.u32 4, %s23
    %s25 = ssub.s32 1, %s24
    %s26 = smul.u32 32, %s25
  $region9: #{_linea_vae_loss_call.1} parent=0 // pred_fallthru
    _
  // Predicated region
  $region10: #{_linea_vae_loss_call.1} parent=0 // pred_check
    _
  $region11: #{_linea_vae_loss_call.1} parent=0 // pred_check_branch
    %28 = sbr.rel (0) target = $region13
  $region12: #{_linea_vae_loss_call.1} parent=0 // pred_region
    %s29 = sadd.s32 0, 0
    %s30 = smul.u32 4, %s29
    %s31 = ssub.s32 1, %s30
    %s32 = smul.u32 32, %s31
    %p33 = scmp.lt.s32.totalorder %s30, 0
    %s34 = scalar_select %p33, %s30, 0
    %s35 = smul.addr %s34, 2
    %s36 = scalar_lea.vmem %s2, %s35
    %s37 = sadd.s32 0, 0
    %s38 = smul.u32 4, %s37
    %s39 = ssub.s32 1, %s38
    %s40 = smul.u32 32, %s39
  $region13: #{_linea_vae_loss_call.1} parent=0 // pred_fallthru
    _
  // Predicated region
  $region14: #{_linea_vae_loss_call.1} parent=0 // pred_check
    _
  $region15: #{_linea_vae_loss_call.1} parent=0 // pred_check_branch
    %42 = sbr.rel (0) target = $region17
  $region16: #{_linea_vae_loss_call.1} parent=0 // pred_region
    %s43 = sadd.s32 0, 0
    %s44 = smul.u32 4, %s43
    %s45 = ssub.s32 1, %s44
    %s46 = smul.u32 32, %s45
    %p47 = scmp.lt.s32.totalorder %s44, 0
    %s48 = scalar_select %p47, %s44, 0
    %s49 = smul.addr %s48, 2
    %s50 = scalar_lea.vmem %s3, %s49
    %s51 = sadd.s32 0, 0
    %s52 = smul.u32 4, %s51
    %s53 = ssub.s32 1, %s52
    %s54 = smul.u32 32, %s53
  $region17: #{_linea_vae_loss_call.1} parent=0 // pred_fallthru
    _
  // Predicated region
  $region18: #{_linea_vae_loss_call.1} parent=0 // pred_check
    _
  $region19: #{_linea_vae_loss_call.1} parent=0 // pred_check_branch
    %56 = sbr.rel (0) target = $region21
  $region20: #{_linea_vae_loss_call.1} parent=0 // pred_region
    %s57 = sadd.s32 0, 0
    %s58 = smul.u32 4, %s57
    %s59 = ssub.s32 1, %s58
    %s60 = smul.u32 32, %s59
    %p61 = scmp.lt.s32.totalorder %s58, 0
    %s62 = scalar_select %p61, %s58, 0
    %s63 = smul.addr %s62, 2
    %s64 = scalar_lea.vmem %s4, %s63
    %s65 = sadd.s32 0, 0
    %s66 = smul.u32 4, %s65
    %s67 = ssub.s32 1, %s66
    %s68 = smul.u32 32, %s67
  $region21: #{_linea_vae_loss_call.1} parent=0 // pred_fallthru
    _
  %s69 = sadd.s32 0, 0
  %s70 = smul.u32 4, %s69
  %s71 = ssub.s32 1, %s70
  %s72 = smul.u32 32, %s71
  %p73 = scmp.lt.s32.totalorder %s70, 0
  %s74 = scalar_select %p73, %s70, 0
  %s75 = smul.addr %s74, 2
  %s76 = scalar_lea.vmem %s1, %s75
  %s77 = sadd.s32 0, 0
  %s78 = smul.u32 4, %s77
  %s79 = ssub.s32 1, %s78
  %s80 = smul.u32 32, %s79
  %p81 = scmp.lt.s32.totalorder %s78, 0
  %s82 = scalar_select %p81, %s78, 0
  %s83 = smul.addr %s82, 2
  %s84 = scalar_lea.vmem %s2, %s83
  %s85 = sadd.s32 0, 0
  %s86 = smul.u32 4, %s85
  %s87 = ssub.s32 1, %s86
  %s88 = smul.u32 32, %s87
  %p89 = scmp.lt.s32.totalorder %s86, 0
  %s90 = scalar_select %p89, %s86, 0
  %s91 = smul.addr %s90, 2
  %s92 = scalar_lea.vmem %s3, %s91
  %s93 = sadd.s32 0, 0
  %s94 = smul.u32 4, %s93
  %s95 = ssub.s32 1, %s94
  %s96 = smul.u32 32, %s95
  %p97 = scmp.lt.s32.totalorder %s94, 0
  %s98 = scalar_select %p97, %s94, 0
  %s99 = smul.addr %s98, 2
  %s100 = scalar_lea.vmem %s4, %s99
  %s101 = sadd.s32 0, 0
  %s102 = smul.u32 4, %s101
  %s103 = ssub.s32 1, %s102
  %s104 = smul.u32 32, %s103
  %p105 = scmp.lt.s32.totalorder %s102, 0
  %s106 = scalar_select %p105, %s102, 0
  %s107 = smul.addr %s106, 2
  %s108 = scalar_lea.vmem %s1, %s107
  %s109 = sadd.s32 0, 0
  %s110 = smul.u32 4, %s109
  %s111 = ssub.s32 1, %s110
  %s112 = smul.u32 32, %s111
  %s113 = sadd.s32 0, 0
  %s114 = smul.u32 4, %s113
  %s115 = ssub.s32 1, %s114
  %s116 = smul.u32 32, %s115
  %p117 = scmp.lt.s32.totalorder %s114, 0
  %s118 = scalar_select %p117, %s114, 0
  %s119 = smul.addr %s118, 2
  %s120 = scalar_lea.vmem %s2, %s119
  %s121 = sadd.s32 0, 0
  %s122 = smul.u32 4, %s121
  %s123 = ssub.s32 1, %s122
  %s124 = smul.u32 32, %s123
  %s125 = sadd.s32 0, 0
  %s126 = smul.u32 4, %s125
  %s127 = ssub.s32 1, %s126
  %s128 = smul.u32 32, %s127
  %p129 = scmp.lt.s32.totalorder %s126, 0
  %s130 = scalar_select %p129, %s126, 0
  %s131 = smul.addr %s130, 2
  %s132 = scalar_lea.vmem %s3, %s131
  %s133 = sadd.s32 0, 0
  %s134 = smul.u32 4, %s133
  %s135 = ssub.s32 1, %s134
  %s136 = smul.u32 32, %s135
  %s137 = sadd.s32 0, 0
  %s138 = smul.u32 4, %s137
  %s139 = ssub.s32 1, %s138
  %s140 = smul.u32 32, %s139
  %p141 = scmp.lt.s32.totalorder %s138, 0
  %s142 = scalar_select %p141, %s138, 0
  %s143 = smul.addr %s142, 2
  %s144 = scalar_lea.vmem %s4, %s143
  %s145 = sadd.s32 0, 0
  %s146 = smul.u32 4, %s145
  %s147 = ssub.s32 1, %s146
  %s148 = smul.u32 32, %s147
  %p149 = scmp.eq.s32.totalorder 0, 0
  // Predicated region
  $region22: #{_linea_vae_loss_call.1} parent=0 // pred_check
    %p150 = pneg %p149
  $region23: #{_linea_vae_loss_call.1} parent=0 // pred_check_branch
    %152 = sbr.rel (%p150) target = $region25
  $region24: #{_linea_vae_loss_call.1} parent=0 // pred_region
    %vm153 = vcmask 261120
    %154 = vst.msk [vmem:[#allocation2] sm:$0xff] %vm153, 0.0
    %vm155 = vcmask 64512
    %156 = vst.msk [vmem:[#allocation3] sm:$0xff] %vm155, 0.0
  $region25: #{_linea_vae_loss_call.1} parent=0 // pred_fallthru
    _
  %s157 = sadd.s32 0, 0
  %s158 = smul.u32 %s157, 8
  %v159 = vlaneseq
  %v160 = vshrl.u32 %v159, 7
  %v161 = vld [vmem:[%s108] sm:$0xff]
  %v162 = vld [vmem:[%s120] sm:$0xff]
  %v163 = vsub.f32 %v161, %v162
  %v164 = vmul.f32 %v163, %v163
  %v165 = vld [vmem:[%s132] sm:$0xff]
  %v166 = vld [vmem:[%s144] sm:$0xff]
  %v167 = vadd.f32 %v166, 1.0
  %v168 = vmul.f32 %v165, %v165
  %v169 = vsub.f32 %v167, %v168
  %v170 = vmul.f32 %v166, 1.442695
  %v171 = vpow.pop %v170
  %v172 = vsub.f32 %v169, %v171
  %v173 = vstv %s158
  %v174 = vadd.s32 %v173, %v160
  %vm175 = vcmp.lt.s32.totalorder %v174, 2
  %v176 = vsel %vm175, 1, 0
  %vm177 = vcmp.eq.s32.totalorder %v176, 1
  %v178 = vsel %vm177, %v164, 0.0
  %v179 = vsel %vm177, %v172, 0.0
  %v180 = vadd.f32 %v178, 0.0
  %v181 = vadd.f32 %v179, 0.0
  %v182 = vld [vmem:[#allocation2] sm:$0xff]
  %v183 = vadd.f32 %v182, %v180
  %vm184 = vcmask 261120
  %185 = vst.msk [vmem:[#allocation2] sm:$0xff] %vm184, %v183
  %v186 = vld [vmem:[#allocation3] sm:$0xff]
  %v187 = vadd.f32 %v186, %v181
  %vm188 = vcmask 64512
  %189 = vst.msk [vmem:[#allocation3] sm:$0xff] %vm188, %v187
  // Predicated region
  $region26: #{_linea_vae_loss_call.1} parent=0 // pred_check
    %p190 = pneg %p149
  $region27: #{_linea_vae_loss_call.1} parent=0 // pred_check_branch
    %192 = sbr.rel (%p190) target = $region29
  $region28: #{_linea_vae_loss_call.1} parent=0 // pred_region
    %v193 = vld [vmem:[#allocation2] sm:$0xff]
    %v194 = vsel %vm184, %v193, 0.0
    %195 = vadd.xlane.f32.xlu0 %v194
    %v196 = vpop.xlane.xlu0 %195
    %v197 = vrot.slane %v196, 4
    %v198 = vadd.f32 %v196, %v197
    %v199 = vrot.slane %v198, 2
    %v200 = vadd.f32 %v198, %v199
    %v201 = vrot.slane %v200, 1
    %v202 = vadd.f32 %v200, %v201
    %s203 = vtos %v202
    %v204 = vld [vmem:[#allocation3] sm:$0xff]
    %v205 = vsel %vm188, %v204, 0.0
    %206 = vadd.xlane.f32.xlu0 %v205
    %v207 = vpop.xlane.xlu0 %206
    %v208 = vrot.slane %v207, 4
    %v209 = vadd.f32 %v207, %v208
    %v210 = vrot.slane %v209, 2
    %v211 = vadd.f32 %v209, %v210
    %v212 = vrot.slane %v211, 1
    %v213 = vadd.f32 %v211, %v212
    %s214 = vtos %v213
    %s215 = smul.f32 %s214, -0.5
    %s216 = sld [smem:[#allocation4]]
    %s217 = smul.f32 %s216, %s215
    %s218 = sadd.f32 %s203, %s217
    %v219 = vstv %s218
    %220 = vst [vmem:[%s5] sm:$0xff] %v219
  $region29: #{_linea_vae_loss_call.1} parent=0 // pred_fallthru
    _
  // Predicated region
  $region30: #{_linea_vae_loss_call.1} parent=0 // pred_check
    _
  $region31: #{_linea_vae_loss_call.1} parent=0 // pred_check_branch
    %222 = sbr.rel (0) target = $region33
  $region32: #{_linea_vae_loss_call.1} parent=0 // pred_region
    _
  $region33: #{_linea_vae_loss_call.1} parent=0 // pred_fallthru
    _
  // Predicated region
  $region34: #{_linea_vae_loss_call.1} parent=0 // pred_check
    _
  $region35: #{_linea_vae_loss_call.1} parent=0 // pred_check_branch
    %224 = sbr.rel (0) target = $region37
  $region36: #{_linea_vae_loss_call.1} parent=0 // pred_region
    _
  $region37: #{_linea_vae_loss_call.1} parent=0 // pred_fallthru
    _

</llo_original>
